<compile_context>
chip_gen: v5e
topology: v5e:2x2
jax: 0.10.0
libtpu: 0.0.40
codegen_flags: <defaults>
</compile_context>

<pallas_src>
import jax
import jax.numpy as jnp
from jax import lax
from jax.experimental import pallas as pl
from jax.experimental.pallas import tpu as pltpu


def _prob_kernel(x_ref, w1_ref, b1_ref, w2_ref, b2_ref, oT_ref):
    """Batch-on-lanes compute; x arrives in its native (tb, in_size) layout.

    x  : (tb, in_size)   caller dtype (f32), DMA'd straight from the original buffer
    w1 : (H, in_size)    compute dtype   (PyTorch nn.Linear (out, in) layout)
    b1 : (H, 1)          f32
    w2 : (out_dim, H)    compute dtype
    b2 : (out_dim, 1)    f32
    oT : (out_dim, tb)   lane-dense output (batch on the lane axis)
    """
    # Dtype cast on the VPU after the DMA (free at mem-bound; noop for f32).
    x = x_ref[...].astype(w1_ref.dtype)
    # fc1: contract in_size of W1 (dim 1) with in_size of the x tile (dim 1)
    # -> (H, tb). Intermediate stays lane-dense; MXU accumulates in f32.
    h = lax.dot_general(w1_ref[...], x,
                        dimension_numbers=(((1,), (1,)), ((), ())),
                        preferred_element_type=jnp.float32)
    h = jnp.maximum(h + b1_ref[...], 0.0)            # bias + ReLU in f32 (VPU)
    # fc2: (out_dim, H) @ (H, tb) -> (out_dim, tb); tb keeps the MXU N-dim busy.
    out = jnp.dot(w2_ref[...], h.astype(w2_ref.dtype),
                  preferred_element_type=jnp.float32)
    oT_ref[...] = (out + b2_ref[...]).astype(oT_ref.dtype)


def _pick_block_b(B_pad, in_size, itemsize, *, target_tile_bytes=2 << 20, min_grid=4):
    """Largest multiple-of-128 batch tile that (a) keeps the x tile ~<= 2 MiB,
    (b) keeps the grid at >= min_grid steps when possible, (c) divides B_pad."""
    assert B_pad % 128 == 0, B_pad
    by_bytes = max(128, (target_tile_bytes // max(1, in_size * itemsize)) // 128 * 128)
    by_grid = max(128, (B_pad // min_grid) // 128 * 128)
    block = min(by_bytes, by_grid, B_pad)
    block = max(128, (block // 128) * 128)
    while B_pad % block != 0:      # B_pad % 128 == 0, so this terminates at 128
        block -= 128
    return block


def prob_forward(x, w1, b1, w2, b2, *, block_b=None, use_pallas=None,
                 compute_dtype=jnp.bfloat16):
    """fc2(relu(fc1(x))).

    x : (B, input_size)
    w1: (hidden, input_size), b1: (hidden,)   -- PyTorch nn.Linear layout
    w2: (2, hidden),          b2: (2,)
    returns (B, 2) in x.dtype
    """
    B, in_size = x.shape
    H = w1.shape[0]
    out_dim = w2.shape[0]
    out_dtype = x.dtype

    if use_pallas is None:
        # pallas_call fixed cost only pays off once the dominant x stream is
        # >= ~1 MiB; below that, fused XLA wins comfortably.
        use_pallas = B * in_size * x.dtype.itemsize >= (1 << 20)

    if not use_pallas:
        # Exact f32 path (matches the PyTorch module); let XLA fuse it.
        h = jnp.maximum(x.astype(jnp.float32) @ w1.T.astype(jnp.float32)
                        + b1.astype(jnp.float32), 0.0)
        out = h @ w2.T.astype(jnp.float32) + b2.astype(jnp.float32)
        return out.astype(out_dtype)

    # Ragged batch: pad to a multiple of 128 so every tile stays lane-aligned
    # and the grid keeps >= 2 steps (never "one giant block").
    B_pad = ((B + 127) // 128) * 128
    x_in = x if B_pad == B else jnp.pad(x, ((0, B_pad - B), (0, 0)))

    if block_b is None:
        block_b = _pick_block_b(B_pad, in_size, x.dtype.itemsize)
    assert B_pad % block_b == 0 and block_b % 128 == 0, (B_pad, block_b)

    # Weights/biases are KiB-scale; casting them wrapper-side is negligible.
    # x itself is NOT touched on the XLA side -- the kernel DMAs the original
    # (padded) buffer exactly once at its native width.
    w1c = w1.astype(compute_dtype)                  # (H, in_size)
    w2c = w2.astype(compute_dtype)                  # (out_dim, H)
    b1c = b1.astype(jnp.float32).reshape(H, 1)
    b2c = b2.astype(jnp.float32).reshape(out_dim, 1)

    grid = (B_pad // block_b,)
    flops = 2 * B_pad * (in_size * H + H * out_dim)
    bytes_accessed = (x_in.size * x_in.dtype.itemsize            # x read once
                      + w1c.size * w1c.dtype.itemsize
                      + w2c.size * w2c.dtype.itemsize
                      + b1c.size * 4 + b2c.size * 4
                      + B_pad * out_dim * jnp.dtype(out_dtype).itemsize)

    outT = pl.pallas_call(
        _prob_kernel,
        out_shape=jax.ShapeDtypeStruct((out_dim, B_pad), out_dtype),
        grid_spec=pltpu.PrefetchScalarGridSpec(
            num_scalar_prefetch=0,
            grid=grid,
            in_specs=[
                pl.BlockSpec((block_b, in_size), lambda i: (i, 0)),  # x tile, native layout
                pl.BlockSpec((H, in_size), lambda i: (0, 0)),        # W1 resident
                pl.BlockSpec((H, 1), lambda i: (0, 0)),              # b1
                pl.BlockSpec((out_dim, H), lambda i: (0, 0)),        # W2
                pl.BlockSpec((out_dim, 1), lambda i: (0, 0)),        # b2
            ],
            out_specs=pl.BlockSpec((out_dim, block_b), lambda i: (0, i)),
        ),
        compiler_params=pltpu.CompilerParams(
            dimension_semantics=("parallel",)),
        cost_estimate=pl.CostEstimate(
            flops=flops, transcendentals=0, bytes_accessed=bytes_accessed),
    )(x_in, w1c, b1c, w2c, b2c)

    out = outT.T                       # (B_pad, out_dim) -- tiny, cheap transpose
    return out if B_pad == B else out[:B]


def xavier_normal(key, fan_out, fan_in, dtype=jnp.float32):
    # torch.nn.init.xavier_normal_: std = sqrt(2 / (fan_in + fan_out));
    # weight stored (out, in) like nn.Linear.
    std = (2.0 / (fan_in + fan_out)) ** 0.5
    return std * jax.random.normal(key, (fan_out, fan_in), dtype=dtype)


if __name__ == "__main__":
    INPUT_SIZE, HIDDEN_SIZE, OUT = 32, 32, 2
    B = 1024  # small; Pallas path is forced below to exercise the kernel (grid=(4,))

    key = jax.random.PRNGKey(0)
    kx, k1, k2 = jax.random.split(key, 3)

    x = jax.random.normal(kx, (B, INPUT_SIZE), dtype=jnp.float32)
    w1 = xavier_normal(k1, HIDDEN_SIZE, INPUT_SIZE)   # (H, in)
    b1 = jnp.zeros((HIDDEN_SIZE,), dtype=jnp.float32)
    w2 = xavier_normal(k2, OUT, HIDDEN_SIZE)          # (2, H)
    b2 = jnp.zeros((OUT,), dtype=jnp.float32)

    HIGH = jax.lax.Precision.HIGHEST
    # True f32 reference (matches the PyTorch module).
    h_f = jnp.maximum(jax.lax.dot(x, w1.T, precision=HIGH) + b1[None, :], 0.0)
    ref_f32 = jax.lax.dot(h_f, w2.T, precision=HIGH) + b2[None, :]
    # Reference mirroring the kernel's bf16-input / f32-accumulate math.
    xq = x.astype(jnp.bfloat16).astype(jnp.float32)
    w1q = w1.astype(jnp.bfloat16).astype(jnp.float32)
    w2q = w2.astype(jnp.bfloat16).astype(jnp.float32)
    hq = jnp.maximum(jax.lax.dot(xq, w1q.T, precision=HIGH) + b1[None, :], 0.0)
    hq = hq.astype(jnp.bfloat16).astype(jnp.float32)
    ref_q = jax.lax.dot(hq, w2q.T, precision=HIGH) + b2[None, :]

    # 1) Pallas path (forced at this small size), default bf16 MXU inputs.
    out = jax.block_until_ready(prob_forward(x, w1, b1, w2, b2, use_pallas=True))
    assert out.shape == (B, OUT)
    assert jnp.allclose(out, ref_q, atol=2e-3, rtol=2e-3), \
        float(jnp.max(jnp.abs(out - ref_q)))
    # Signed-off precision deviation: bf16 MXU inputs vs the f32 module.
    assert jnp.allclose(out, ref_f32, atol=5e-2, rtol=5e-2), \
        float(jnp.max(jnp.abs(out - ref_f32)))

    # 2) Ragged batch (not a multiple of 128) exercises the padding path.
    Br = 300
    out_r = jax.block_until_ready(
        prob_forward(x[:Br], w1, b1, w2, b2, use_pallas=True))
    assert out_r.shape == (Br, OUT)
    assert jnp.allclose(out_r, ref_q[:Br], atol=2e-3, rtol=2e-3)

    # 3) Exact-precision Pallas path (compute_dtype=f32) vs the f32 module.
    out_f = jax.block_until_ready(
        prob_forward(x, w1, b1, w2, b2, use_pallas=True,
                     compute_dtype=jnp.float32))
    assert jnp.allclose(out_f, ref_f32, atol=2e-2, rtol=2e-2), \
        float(jnp.max(jnp.abs(out_f - ref_f32)))

    # 4) Auto heuristic: at this size the fused-XLA fallback is used.
    out_auto = jax.block_until_ready(prob_forward(x, w1, b1, w2, b2))
    assert jnp.allclose(out_auto, ref_f32, atol=2e-2, rtol=2e-2)

    print("KERNEL_OK")
</pallas_src>

<mosaic_0001>
module attributes {stable_mosaic.version = 11 : i64} {
  func.func @_prob_kernel(%arg0: i32, %arg1: memref<256x32xf32, #tpu.memory_space<vmem>>, %arg2: memref<32x32xbf16, #tpu.memory_space<vmem>>, %arg3: memref<32x1xf32, #tpu.memory_space<vmem>>, %arg4: memref<2x32xbf16, #tpu.memory_space<vmem>>, %arg5: memref<2x1xf32, #tpu.memory_space<vmem>>, %arg6: memref<2x256xf32, #tpu.memory_space<vmem>>) attributes {dimension_semantics = [#tpu.dimension_semantics<parallel>], iteration_bounds = array<i64: 4>, scalar_prefetch = 0 : i64, scratch_operands = 0 : i64, tpu.core_type = #tpu.core_type<tc>, window_params = [{transform_indices = @transform_0, window_bounds = array<i64: 256, 32>}, {pipeline_mode = #tpu.pipeline_mode<synchronous>, transform_indices = @transform_1, window_bounds = array<i64: 32, 32>}, {pipeline_mode = #tpu.pipeline_mode<synchronous>, transform_indices = @transform_2, window_bounds = array<i64: 32, 1>}, {pipeline_mode = #tpu.pipeline_mode<synchronous>, transform_indices = @transform_3, window_bounds = array<i64: 2, 32>}, {pipeline_mode = #tpu.pipeline_mode<synchronous>, transform_indices = @transform_4, window_bounds = array<i64: 2, 1>}, {transform_indices = @transform_5, window_bounds = array<i64: 2, 256>}]} {
    %c0 = arith.constant 0 : index
    %c0_0 = arith.constant 0 : index
    %0 = vector.load %arg1[%c0, %c0_0] : memref<256x32xf32, #tpu.memory_space<vmem>>, vector<256x32xf32>
    %1 = arith.truncf %0 : vector<256x32xf32> to vector<256x32xbf16>
    %c0_1 = arith.constant 0 : index
    %c0_2 = arith.constant 0 : index
    %2 = vector.load %arg2[%c0_1, %c0_2] : memref<32x32xbf16, #tpu.memory_space<vmem>>, vector<32x32xbf16>
    %cst = arith.constant dense<0.000000e+00> : vector<32x256xf32>
    %3 = tpu.matmul %2, %1, %cst {dimension_numbers = #tpu.dot_dimension_numbers<[1], [1], [0], [0], [0, 0, 1, 0], [], []>} : vector<32x32xbf16>, vector<256x32xbf16>, vector<32x256xf32> -> vector<32x256xf32>
    %c0_3 = arith.constant 0 : index
    %c0_4 = arith.constant 0 : index
    %4 = vector.load %arg3[%c0_3, %c0_4] : memref<32x1xf32, #tpu.memory_space<vmem>>, vector<32x1xf32>
    %5 = vector.broadcast %4 : vector<32x1xf32> to vector<32x256xf32>
    %6 = arith.addf %3, %5 : vector<32x256xf32>
    %cst_5 = arith.constant 0.000000e+00 : f32
    %7 = vector.broadcast %cst_5 : f32 to vector<32x256xf32>
    %8 = arith.maximumf %6, %7 : vector<32x256xf32>
    %c0_6 = arith.constant 0 : index
    %c0_7 = arith.constant 0 : index
    %9 = vector.load %arg4[%c0_6, %c0_7] : memref<2x32xbf16, #tpu.memory_space<vmem>>, vector<2x32xbf16>
    %10 = arith.truncf %8 : vector<32x256xf32> to vector<32x256xbf16>
    %cst_8 = arith.constant dense<0.000000e+00> : vector<2x256xf32>
    %11 = tpu.matmul %9, %10, %cst_8 {dimension_numbers = #tpu.dot_dimension_numbers<[1], [0], [0], [1], [0, 0, 1, 1], [], []>} : vector<2x32xbf16>, vector<32x256xbf16>, vector<2x256xf32> -> vector<2x256xf32>
    %c0_9 = arith.constant 0 : index
    %c0_10 = arith.constant 0 : index
    %12 = vector.load %arg5[%c0_9, %c0_10] : memref<2x1xf32, #tpu.memory_space<vmem>>, vector<2x1xf32>
    %13 = vector.broadcast %12 : vector<2x1xf32> to vector<2x256xf32>
    %14 = arith.addf %11, %13 : vector<2x256xf32>
    %c0_11 = arith.constant 0 : index
    %c0_12 = arith.constant 0 : index
    %15 = vector.load %arg6[%c0_11, %c0_12] : memref<2x256xf32, #tpu.memory_space<vmem>>, vector<2x256xf32>
    tpu.vector_store %arg6[%c0_11, %c0_12], %14 {strides = array<i32>} : memref<2x256xf32, #tpu.memory_space<vmem>>, vector<2x256xf32>,
    return
  }
  func.func @transform_0(%arg0: i32) -> (i32, i32) {
    %c0_i32 = arith.constant 0 : i32
    %c0_i32_0 = arith.constant 0 : i32
    return %arg0, %c0_i32 : i32, i32
  }
  func.func @transform_1(%arg0: i32) -> (i32, i32) {
    %c0_i32 = arith.constant 0 : i32
    %c0_i32_0 = arith.constant 0 : i32
    %c0_i32_1 = arith.constant 0 : i32
    return %c0_i32, %c0_i32_0 : i32, i32
  }
  func.func @transform_2(%arg0: i32) -> (i32, i32) {
    %c0_i32 = arith.constant 0 : i32
    %c0_i32_0 = arith.constant 0 : i32
    %c0_i32_1 = arith.constant 0 : i32
    return %c0_i32, %c0_i32_0 : i32, i32
  }
  func.func @transform_3(%arg0: i32) -> (i32, i32) {
    %c0_i32 = arith.constant 0 : i32
    %c0_i32_0 = arith.constant 0 : i32
    %c0_i32_1 = arith.constant 0 : i32
    return %c0_i32, %c0_i32_0 : i32, i32
  }
  func.func @transform_4(%arg0: i32) -> (i32, i32) {
    %c0_i32 = arith.constant 0 : i32
    %c0_i32_0 = arith.constant 0 : i32
    %c0_i32_1 = arith.constant 0 : i32
    return %c0_i32, %c0_i32_0 : i32, i32
  }
  func.func @transform_5(%arg0: i32) -> (i32, i32) {
    %c0_i32 = arith.constant 0 : i32
    %c0_i32_0 = arith.constant 0 : i32
    return %c0_i32, %arg0 : i32, i32
  }
}

</mosaic_0001>

<llo_original>
// kernel: tpu_custom_call.1
$region0: #{tpu_custom_call.1}
  #allocation0 [shape = 'u32[]', space=smem, size = 0x4, offset = 0x4, fixed_abs, tag = 'smem constant byte address 0x4 - core index']
  #allocation1 [shape = 'u32[72,128]{1,0:T(1,128)}', space=vmem, size = 0x9000, scoped, tag = 'internal scratch']
  %s0 = inlined_call_operand.vmem [shape: f32[1024,32], index: 0, kind: input, shape index: {}]
  %s1 = inlined_call_operand.vmem [shape: bf16[32,32], index: 1, kind: input, shape index: {}]
  %s2 = inlined_call_operand.vmem [shape: f32[32,1], index: 2, kind: input, shape index: {}]
  %s3 = inlined_call_operand.vmem [shape: bf16[2,32], index: 3, kind: input, shape index: {}]
  %s4 = inlined_call_operand.vmem [shape: f32[2,1], index: 4, kind: input, shape index: {}]
  %s5 = inlined_call_operand.hbm [shape: f32[2,1024], index: 5, kind: output, shape index: {}]
  %s6 = sld [smem:[#allocation0]]
  $region53: #{tpu_custom_call.1} parent=0
    _
  %s8 = ssub.s32 1, %s6
  %s9 = scalar_select 0, %s8, %s6
  $region1: #{tpu_custom_call.1} parent=0
    #allocation2 [shape = 'u8[4096]{0}', space=vmem, size = 0x1000, scoped, tag = 'output window, operand 0']
    #allocation3 [shape = 's32[2]{0}', space=sflag, size = 0x8, scoped, tag = 'scoped memory for tpu_custom_call.1']
    %10 = vsyncpa [#allocation3], 0
    %s11 = scalar_lea.sflag [#allocation3], 1
    %12 = vsyncpa %s11, 0
    loop: start=0, step=1, limit=6
    $region2: #{tpu_custom_call.1} parent=1 // loop_pre_header
      _
    $region3: #{tpu_custom_call.1} parent=1 // loop_header
      %s14 = sphi 0, %s18
      %p15 = scmp.ge.s32.totalorder %s14, 6
      %s24 = sphi 0, %s26
      %s27 = sphi 0, %s24
      %s28 = sphi 0, %s27
      %s44 = sphi 0, %s28
      %s48 = sphi 0, %s48
      %s50 = sphi 0, %s48
      %s51 = sphi 0, %s50
      %s65 = sphi 0, %s51
      %s69 = sphi 0, %s69
      %s71 = sphi 0, %s69
      %s72 = sphi 0, %s71
      %s86 = sphi 0, %s72
      %s90 = sphi 0, %s90
      %s92 = sphi 0, %s90
      %s93 = sphi 0, %s92
      %s107 = sphi 0, %s93
      %s111 = sphi 0, %s111
      %s113 = sphi 0, %s111
      %s114 = sphi 0, %s113
      %s128 = sphi 0, %s114
      %s134 = sphi 0, %s136
      %s137 = sphi 0, %s134
      %s138 = sphi 0, %s137
      %s154 = sphi 0, %s138
    $region4: #{tpu_custom_call.1} parent=1 // loop_header_branch
      %17 = sbr.rel (%p15) target = $region8
    $region5: #{tpu_custom_call.1} parent=1 // loop_body
      %s19 = ssub.s32 %s14, 1
      %s20 = ssub.s32 %s14, 2
      %s21 = sadd.s32 %s14, 1
      %s22 = ssub.s32 %s14, %s21
      %p23 = scmp.eq.s32.totalorder %s22, 0
      %s25 = sadd.s32 %s24, 1
      %s26 = scalar_select %p23, %s24, %s25
      %p29 = pneg %p23
      %p30 = scmp.eq.s32.totalorder %s14, 3
      %p31 = por %p29, %p30
      %p32 = scmp.ne.s32.totalorder %s24, %s27
      %p33 = scmp.eq.s32.totalorder %s14, 0
      %p34 = por %p32, %p33
      %p35 = scmp.ne.s32.totalorder %s24, %s27
      %p36 = scmp.eq.s32.totalorder %s19, 3
      %p37 = por %p35, %p36
      %p38 = scmp.ne.s32.totalorder %s27, %s28
      %p39 = scmp.eq.s32.totalorder %s19, 0
      %p40 = por %p38, %p39
      %p41 = scmp.ne.s32.totalorder %s27, %s28
      %p42 = scmp.eq.s32.totalorder %s20, 3
      %p43 = por %p41, %p42
      %p45 = scmp.ne.s32.totalorder %s28, %s44
      %p46 = scmp.eq.s32.totalorder %s20, 0
      %p47 = por %p45, %p46
      %s49 = sadd.s32 %s48, 1
      %p52 = scmp.eq.s32.totalorder %s14, 3
      %p53 = scmp.ne.s32.totalorder %s48, %s50
      %p54 = scmp.eq.s32.totalorder %s14, 0
      %p55 = por %p53, %p54
      %p56 = scmp.ne.s32.totalorder %s48, %s50
      %p57 = scmp.eq.s32.totalorder %s19, 3
      %p58 = por %p56, %p57
      %p59 = scmp.ne.s32.totalorder %s50, %s51
      %p60 = scmp.eq.s32.totalorder %s19, 0
      %p61 = por %p59, %p60
      %p62 = scmp.ne.s32.totalorder %s50, %s51
      %p63 = scmp.eq.s32.totalorder %s20, 3
      %p64 = por %p62, %p63
      %p66 = scmp.ne.s32.totalorder %s51, %s65
      %p67 = scmp.eq.s32.totalorder %s20, 0
      %p68 = por %p66, %p67
      %s70 = sadd.s32 %s69, 1
      %p73 = scmp.eq.s32.totalorder %s14, 3
      %p74 = scmp.ne.s32.totalorder %s69, %s71
      %p75 = scmp.eq.s32.totalorder %s14, 0
      %p76 = por %p74, %p75
      %p77 = scmp.ne.s32.totalorder %s69, %s71
      %p78 = scmp.eq.s32.totalorder %s19, 3
      %p79 = por %p77, %p78
      %p80 = scmp.ne.s32.totalorder %s71, %s72
      %p81 = scmp.eq.s32.totalorder %s19, 0
      %p82 = por %p80, %p81
      %p83 = scmp.ne.s32.totalorder %s71, %s72
      %p84 = scmp.eq.s32.totalorder %s20, 3
      %p85 = por %p83, %p84
      %p87 = scmp.ne.s32.totalorder %s72, %s86
      %p88 = scmp.eq.s32.totalorder %s20, 0
      %p89 = por %p87, %p88
      %s91 = sadd.s32 %s90, 1
      %p94 = scmp.eq.s32.totalorder %s14, 3
      %p95 = scmp.ne.s32.totalorder %s90, %s92
      %p96 = scmp.eq.s32.totalorder %s14, 0
      %p97 = por %p95, %p96
      %p98 = scmp.ne.s32.totalorder %s90, %s92
      %p99 = scmp.eq.s32.totalorder %s19, 3
      %p100 = por %p98, %p99
      %p101 = scmp.ne.s32.totalorder %s92, %s93
      %p102 = scmp.eq.s32.totalorder %s19, 0
      %p103 = por %p101, %p102
      %p104 = scmp.ne.s32.totalorder %s92, %s93
      %p105 = scmp.eq.s32.totalorder %s20, 3
      %p106 = por %p104, %p105
      %p108 = scmp.ne.s32.totalorder %s93, %s107
      %p109 = scmp.eq.s32.totalorder %s20, 0
      %p110 = por %p108, %p109
      %s112 = sadd.s32 %s111, 1
      %p115 = scmp.eq.s32.totalorder %s14, 3
      %p116 = scmp.ne.s32.totalorder %s111, %s113
      %p117 = scmp.eq.s32.totalorder %s14, 0
      %p118 = por %p116, %p117
      %p119 = scmp.ne.s32.totalorder %s111, %s113
      %p120 = scmp.eq.s32.totalorder %s19, 3
      %p121 = por %p119, %p120
      %p122 = scmp.ne.s32.totalorder %s113, %s114
      %p123 = scmp.eq.s32.totalorder %s19, 0
      %p124 = por %p122, %p123
      %p125 = scmp.ne.s32.totalorder %s113, %s114
      %p126 = scmp.eq.s32.totalorder %s20, 3
      %p127 = por %p125, %p126
      %p129 = scmp.ne.s32.totalorder %s114, %s128
      %p130 = scmp.eq.s32.totalorder %s20, 0
      %p131 = por %p129, %p130
      %s132 = ssub.s32 %s14, %s21
      %p133 = scmp.eq.s32.totalorder %s132, 0
      %s135 = sadd.s32 %s134, 1
      %s136 = scalar_select %p133, %s134, %s135
      %p139 = pneg %p133
      %p140 = scmp.eq.s32.totalorder %s14, 3
      %p141 = por %p139, %p140
      %p142 = scmp.ne.s32.totalorder %s134, %s137
      %p143 = scmp.eq.s32.totalorder %s14, 0
      %p144 = por %p142, %p143
      %p145 = scmp.ne.s32.totalorder %s134, %s137
      %p146 = scmp.eq.s32.totalorder %s19, 3
      %p147 = por %p145, %p146
      %p148 = scmp.ne.s32.totalorder %s137, %s138
      %p149 = scmp.eq.s32.totalorder %s19, 0
      %p150 = por %p148, %p149
      %p151 = scmp.ne.s32.totalorder %s137, %s138
      %p152 = scmp.eq.s32.totalorder %s20, 3
      %p153 = por %p151, %p152
      %p155 = scmp.ne.s32.totalorder %s138, %s154
      %p156 = scmp.eq.s32.totalorder %s20, 0
      %p157 = por %p155, %p156
      %p158 = scmp.le.s32.totalorder 1, %s14
      %p159 = scmp.lt.s32.totalorder %s14, 5
      %p160 = pnand %p158, %p159
      %p161 = pneg %p160
      // Predicated region
      $region9: #{tpu_custom_call.1} parent=5 // pred_check
        _
      $region10: #{tpu_custom_call.1} parent=5 // pred_check_branch
        %163 = sbr.rel (%p160) target = $region12
      $region11: #{tpu_custom_call.1} parent=5 // pred_region
        %s164 = ssub.s32 %s14, 1
        // Predicated region
        $region13: #{tpu_custom_call.1} parent=11 // pred_check
          %p165 = pneg %p61
        $region14: #{tpu_custom_call.1} parent=11 // pred_check_branch
          %167 = sbr.rel (%p165) target = $region16
        $region15: #{tpu_custom_call.1} parent=11 // pred_region
          _
        $region16: #{tpu_custom_call.1} parent=11 // pred_fallthru
          _
        // Predicated region
        $region17: #{tpu_custom_call.1} parent=11 // pred_check
          %p168 = pneg %p82
        $region18: #{tpu_custom_call.1} parent=11 // pred_check_branch
          %170 = sbr.rel (%p168) target = $region20
        $region19: #{tpu_custom_call.1} parent=11 // pred_region
          _
        $region20: #{tpu_custom_call.1} parent=11 // pred_fallthru
          _
        // Predicated region
        $region21: #{tpu_custom_call.1} parent=11 // pred_check
          %p171 = pneg %p103
        $region22: #{tpu_custom_call.1} parent=11 // pred_check_branch
          %173 = sbr.rel (%p171) target = $region24
        $region23: #{tpu_custom_call.1} parent=11 // pred_region
          _
        $region24: #{tpu_custom_call.1} parent=11 // pred_fallthru
          _
        // Predicated region
        $region25: #{tpu_custom_call.1} parent=11 // pred_check
          %p174 = pneg %p124
        $region26: #{tpu_custom_call.1} parent=11 // pred_check_branch
          %176 = sbr.rel (%p174) target = $region28
        $region27: #{tpu_custom_call.1} parent=11 // pred_region
          _
        $region28: #{tpu_custom_call.1} parent=11 // pred_fallthru
          _
      $region12: #{tpu_custom_call.1} parent=5 // pred_fallthru
        _
      %p177 = scmp.lt.s32.totalorder %s14, 4
      // Predicated region
      $region29: #{tpu_custom_call.1} parent=5 // pred_check
        %p178 = pneg %p177
      $region30: #{tpu_custom_call.1} parent=5 // pred_check_branch
        %180 = sbr.rel (%p178) target = $region32
      $region31: #{tpu_custom_call.1} parent=5 // pred_region
        // Predicated region
        $region33: #{tpu_custom_call.1} parent=31 // pred_check
          %p181 = pneg %p34
        $region34: #{tpu_custom_call.1} parent=31 // pred_check_branch
          %183 = sbr.rel (%p181) target = $region36
        $region35: #{tpu_custom_call.1} parent=31 // pred_region
          %s184 = smul.u32 32, %s14
          %p185 = scmp.lt.s32.totalorder %s184, 127
          %s186 = scalar_select %p185, %s184, 127
          %s187 = smul.addr %s186, 8
          %s188 = scalar_lea.vmem %s0, %s187
          %s189 = smul.u32 32, %s14
        $region36: #{tpu_custom_call.1} parent=31 // pred_fallthru
          _
      $region32: #{tpu_custom_call.1} parent=5 // pred_fallthru
        _
      %p190 = scmp.le.s32.totalorder 1, %s14
      %p191 = scmp.lt.s32.totalorder %s14, 5
      %p192 = pnand %p190, %p191
      %p193 = pneg %p192
      // Predicated region
      $region37: #{tpu_custom_call.1} parent=5 // pred_check
        _
      $region38: #{tpu_custom_call.1} parent=5 // pred_check_branch
        %195 = sbr.rel (%p192) target = $region40
      $region39: #{tpu_custom_call.1} parent=5 // pred_region
        %s196 = ssub.s32 %s14, 1
        %s197 = smul.u32 32, %s19
        %p198 = scmp.lt.s32.totalorder %s197, 127
        %s199 = scalar_select %p198, %s197, 127
        %s200 = smul.addr %s199, 8
        %s201 = scalar_lea.vmem %s0, %s200
        %p202 = pneg %p40
        %p203 = pneg %p37
        %p204 = pneg %p61
        %p205 = pneg %p58
        %p206 = pneg %p82
        %p207 = pneg %p79
        %p208 = pneg %p103
        %p209 = pneg %p100
        %p210 = pneg %p124
        %p211 = pneg %p121
        %p212 = pneg %p150
        %p213 = pneg %p147
        %s214 = sand.u32 %s137, 1
        %s215 = scalar_lea.sflag [#allocation3], %s214
        %s216 = sand.u32 %s137, 1
        %s217 = smul.addr %s216, 4
        %s218 = scalar_lea.vmem [#allocation2], %s217
        %s219 = smul.u32 32, %s19
        %p220 = scmp.lt.s32.totalorder %s219, 127
        %s221 = scalar_select %p220, %s219, 127
        %s222 = smul.addr %s221, 8
        %s223 = scalar_lea.vmem %s0, %s222
        %s224 = smul.u32 32, %s19
        %s225 = smul.u32 2, %s19
        %v227 = vld [vmem:[%s223] sm:$0xff]
        %v228 = vld [vmem:[%s223 + $0x8] sm:$0xff]
        %v229 = vld [vmem:[%s223 + $0x10] sm:$0xff]
        %v230 = vld [vmem:[%s223 + $0x18] sm:$0xff]
        %v231 = vld [vmem:[%s223 + $0x20] sm:$0xff]
        %v232 = vld [vmem:[%s223 + $0x28] sm:$0xff]
        %v233 = vld [vmem:[%s223 + $0x30] sm:$0xff]
        %v234 = vld [vmem:[%s223 + $0x38] sm:$0xff]
        %v235 = vld [vmem:[%s223 + $0x40] sm:$0xff]
        %v236 = vld [vmem:[%s223 + $0x48] sm:$0xff]
        %v237 = vld [vmem:[%s223 + $0x50] sm:$0xff]
        %v238 = vld [vmem:[%s223 + $0x58] sm:$0xff]
        %v239 = vld [vmem:[%s223 + $0x60] sm:$0xff]
        %v240 = vld [vmem:[%s223 + $0x68] sm:$0xff]
        %v241 = vld [vmem:[%s223 + $0x70] sm:$0xff]
        %v242 = vld [vmem:[%s223 + $0x78] sm:$0xff]
        %v243 = vld [vmem:[%s223 + $0x80] sm:$0xff]
        %v244 = vld [vmem:[%s223 + $0x88] sm:$0xff]
        %v245 = vld [vmem:[%s223 + $0x90] sm:$0xff]
        %v246 = vld [vmem:[%s223 + $0x98] sm:$0xff]
        %v247 = vld [vmem:[%s223 + $0xa0] sm:$0xff]
        %v248 = vld [vmem:[%s223 + $0xa8] sm:$0xff]
        %v249 = vld [vmem:[%s223 + $0xb0] sm:$0xff]
        %v250 = vld [vmem:[%s223 + $0xb8] sm:$0xff]
        %v251 = vld [vmem:[%s223 + $0xc0] sm:$0xff]
        %v252 = vld [vmem:[%s223 + $0xc8] sm:$0xff]
        %v253 = vld [vmem:[%s223 + $0xd0] sm:$0xff]
        %v254 = vld [vmem:[%s223 + $0xd8] sm:$0xff]
        %v255 = vld [vmem:[%s223 + $0xe0] sm:$0xff]
        %v256 = vld [vmem:[%s223 + $0xe8] sm:$0xff]
        %v257 = vld [vmem:[%s223 + $0xf0] sm:$0xff]
        %v258 = vld [vmem:[%s223 + $0xf8] sm:$0xff]
        %v259 = vpack.c.bf16 %v228, %v227
        %v260 = vpack.c.bf16 %v230, %v229
        %v261 = vpack.c.bf16 %v232, %v231
        %v262 = vpack.c.bf16 %v234, %v233
        %v263 = vpack.c.bf16 %v236, %v235
        %v264 = vpack.c.bf16 %v238, %v237
        %v265 = vpack.c.bf16 %v240, %v239
        %v266 = vpack.c.bf16 %v242, %v241
        %v267 = vpack.c.bf16 %v244, %v243
        %v268 = vpack.c.bf16 %v246, %v245
        %v269 = vpack.c.bf16 %v248, %v247
        %v270 = vpack.c.bf16 %v250, %v249
        %v271 = vpack.c.bf16 %v252, %v251
        %v272 = vpack.c.bf16 %v254, %v253
        %v273 = vpack.c.bf16 %v256, %v255
        %v274 = vpack.c.bf16 %v258, %v257
        %v275 = vld [vmem:[%s1] sm:$0xf]
        %v276 = vld [vmem:[%s1 + $0x4] sm:$0xf]
        %v277 = vld [vmem:[%s1 + $0x8] sm:$0xf]
        %v278 = vld [vmem:[%s1 + $0xc] sm:$0xf]
        %v279 = vld [vmem:[%s2] sm:$0xff]
        %v280 = vld [vmem:[%s2 + $0x8] sm:$0xff]
        %v281 = vld [vmem:[%s2 + $0x10] sm:$0xff]
        %v282 = vld [vmem:[%s2 + $0x18] sm:$0xff]
        %284 = vset.pattern.permute.xlu0 0
        %285 = vperm.xlu0 %284, %v279
        %v286 = vpop.permute.xlu0 %285
        %289 = vset.pattern.permute.xlu0 0
        %290 = vperm.xlu0 %289, %v280
        %v291 = vpop.permute.xlu0 %290
        %294 = vset.pattern.permute.xlu0 0
        %295 = vperm.xlu0 %294, %v281
        %v296 = vpop.permute.xlu0 %295
        %299 = vset.pattern.permute.xlu0 0
        %300 = vperm.xlu0 %299, %v282
        %v301 = vpop.permute.xlu0 %300
        %v307 = vunpack.c.l.b16 %v275
        %v308 = vunpack.c.l.b16 %v276
        %v309 = vunpack.c.l.b16 %v277
        %v310 = vunpack.c.l.b16 %v278
        %v311 = vpack.c.b16 %v308, %v307
        %v312 = vpack.c.b16 %v310, %v309
        %vm313 = vcmask 261120
        %v315 = vsel %vm313, %v311, 0
        %v318 = vsel %vm313, %v312, 0
        %v321 = vsel %vm313, %v259, 0
        %v324 = vsel %vm313, %v260, 0
        %v327 = vsel %vm313, %v261, 0
        %v330 = vsel %vm313, %v262, 0
        %v333 = vsel %vm313, %v263, 0
        %v336 = vsel %vm313, %v264, 0
        %v339 = vsel %vm313, %v265, 0
        %v342 = vsel %vm313, %v266, 0
        %v345 = vsel %vm313, %v267, 0
        %v348 = vsel %vm313, %v268, 0
        %v351 = vsel %vm313, %v269, 0
        %v354 = vsel %vm313, %v270, 0
        %v357 = vsel %vm313, %v271, 0
        %v360 = vsel %vm313, %v272, 0
        %v363 = vsel %vm313, %v273, 0
        %v366 = vsel %vm313, %v274, 0
        %368 = vmatpush.bf16.xpose.msra.mxu0 %v342
        %369 = vmatpush.bf16.xpose.msra.mxu0 %v339
        %370 = vmatpush.bf16.xpose.msra.mxu0 %v336
        %371 = vmatpush.bf16.xpose.msra.mxu0 %v333
        %372 = vmatpush.bf16.xpose.msra.mxu0 %v330
        %373 = vmatpush.bf16.xpose.msra.mxu0 %v327
        %374 = vmatpush.bf16.xpose.msra.mxu0 %v324
        %375 = vmatpush.bf16.xpose.msra.mxu0 %v321
        %376 = vmatmul.bf16.gmra.mxu0 %v315
        %v377 = vpop.f32.mrf.mxu0
        %v378 = vadd.f32 %v286, %v377
        %v379 = vpop.f32.mrf.mxu0
        %v380 = vadd.f32 %v291, %v379
        %381 = vmatmul.bf16.gmra.mxu0 %v318
        %v382 = vpop.f32.mrf.mxu0
        %v383 = vadd.f32 %v296, %v382
        %v384 = vpop.f32.mrf.mxu0
        %v385 = vadd.f32 %v301, %v384
        %386 = vdwg.mxu0
        %387 = vmatpush.bf16.xpose.msra.mxu0 %v366
        %388 = vmatpush.bf16.xpose.msra.mxu0 %v363
        %389 = vmatpush.bf16.xpose.msra.mxu0 %v360
        %390 = vmatpush.bf16.xpose.msra.mxu0 %v357
        %391 = vmatpush.bf16.xpose.msra.mxu0 %v354
        %392 = vmatpush.bf16.xpose.msra.mxu0 %v351
        %393 = vmatpush.bf16.xpose.msra.mxu0 %v348
        %394 = vmatpush.bf16.xpose.msra.mxu0 %v345
        %395 = vmatmul.bf16.gmra.mxu0 %v315
        %v396 = vpop.f32.mrf.mxu0
        %v397 = vadd.f32 %v286, %v396
        %v398 = vpop.f32.mrf.mxu0
        %v399 = vadd.f32 %v291, %v398
        %400 = vmatmul.bf16.gmra.mxu0 %v318
        %v401 = vpop.f32.mrf.mxu0
        %v402 = vadd.f32 %v296, %v401
        %v403 = vpop.f32.mrf.mxu0
        %v404 = vadd.f32 %v301, %v403
        %405 = vdwg.mxu0
        %v406 = vmax.f32 %v378, 0.0
        %v407 = vmax.f32 %v397, 0.0
        %v408 = vmax.f32 %v380, 0.0
        %v409 = vmax.f32 %v399, 0.0
        %v410 = vmax.f32 %v383, 0.0
        %v411 = vmax.f32 %v402, 0.0
        %v412 = vmax.f32 %v385, 0.0
        %v413 = vmax.f32 %v404, 0.0
        %v414 = vld [vmem:[%s3] sm:$0x1]
        %v415 = vpack.c.bf16 %v408, %v406
        %v416 = vpack.c.bf16 %v409, %v407
        %v417 = vpack.c.bf16 %v412, %v410
        %v418 = vpack.c.bf16 %v413, %v411
        %v419 = vld [vmem:[%s4] sm:$0x3]
        %421 = vset.pattern.permute.xlu0 0
        %422 = vperm.xlu0 %421, %v419
        %v423 = vpop.permute.xlu0 %422
        %v426 = vsel %vm313, %v414, 0
        %428 = vmatpush.bf16.msra.mxu0 0
        %429 = vmatpush.bf16.msra.mxu0 0
        %430 = vmatpush.bf16.msra.mxu0 0
        %431 = vmatpush.bf16.msra.mxu0 0
        %432 = vmatpush.bf16.msra.mxu0 0
        %433 = vmatpush.bf16.msra.mxu0 0
        %434 = vmatpush.bf16.msra.mxu0 %v417
        %435 = vmatpush.bf16.msra.mxu0 %v415
        %436 = vmatmul.bf16.gmra.mxu0 %v426
        %v437 = vpop.f32.mrf.mxu0
        %v438 = vadd.f32 %v423, %v437
        %v439 = vpop.f32.mrf.mxu0
        %440 = vdwg.mxu0
        %441 = vmatpush.bf16.msra.mxu0 0
        %442 = vmatpush.bf16.msra.mxu0 0
        %443 = vmatpush.bf16.msra.mxu0 0
        %444 = vmatpush.bf16.msra.mxu0 0
        %445 = vmatpush.bf16.msra.mxu0 0
        %446 = vmatpush.bf16.msra.mxu0 0
        %447 = vmatpush.bf16.msra.mxu0 %v418
        %448 = vmatpush.bf16.msra.mxu0 %v416
        %449 = vmatmul.bf16.gmra.mxu0 %v426
        %v450 = vpop.f32.mrf.mxu0
        %v451 = vadd.f32 %v423, %v450
        %v452 = vpop.f32.mrf.mxu0
        %453 = vdwg.mxu0
        %v456 = vrot.slane %v451, 6
        %vm457 = vcmask 1041408
        %v458 = vsel %vm457, %v438, %v456
        %460 = vst [vmem:[%s218] sm:$0xf] %v458
        %s461 = sand.u32 %s137, 1
        %s462 = scalar_lea.sflag [#allocation3], %s461
        %s463 = sand.u32 %s137, 1
        %s464 = smul.addr %s463, 4
        %s465 = scalar_lea.vmem [#allocation2], %s464
        // Predicated region
        $region41: #{tpu_custom_call.1} parent=39 // pred_check
          %p466 = pneg %p147
        $region42: #{tpu_custom_call.1} parent=39 // pred_check_branch
          %468 = sbr.rel (%p466) target = $region44
        $region43: #{tpu_custom_call.1} parent=39 // pred_region
          %s469 = smul.u32 2, %s19
          %471 = vsyncadd %s462, 0
          %s472 = smul.addr %s469, 2
          %s473 = scalar_lea.hbm %s5, %s472
          %s475 = sshll.u32 %s465, 4
          %s476 = int_to_ptr.vmem [resolvable:$true] %s475
          %s477 = sshll.u32 %s473, 4
          %s478 = int_to_ptr.hbm [resolvable:$true] %s477
          %480 = dma.vmem_to_hbm [thread:$0]  %s476, 64, %s478, %s462
        $region44: #{tpu_custom_call.1} parent=39 // pred_fallthru
          _
      $region40: #{tpu_custom_call.1} parent=5 // pred_fallthru
        _
      %p481 = scmp.le.s32.totalorder 2, %s14
      // Predicated region
      $region45: #{tpu_custom_call.1} parent=5 // pred_check
        %p482 = pneg %p481
      $region46: #{tpu_custom_call.1} parent=5 // pred_check_branch
        %484 = sbr.rel (%p482) target = $region48
      $region47: #{tpu_custom_call.1} parent=5 // pred_region
        %s485 = ssub.s32 %s14, 2
        // Predicated region
        $region49: #{tpu_custom_call.1} parent=47 // pred_check
          %p486 = pneg %p153
        $region50: #{tpu_custom_call.1} parent=47 // pred_check_branch
          %488 = sbr.rel (%p486) target = $region52
        $region51: #{tpu_custom_call.1} parent=47 // pred_region
          %s489 = sand.u32 %s138, 1
          %s490 = scalar_lea.sflag [#allocation3], %s489
          %s491 = sand.u32 %s138, 1
          %s492 = smul.addr %s491, 4
          %s493 = scalar_lea.vmem [#allocation2], %s492
          %495 = dma.done %s490, 64
        $region52: #{tpu_custom_call.1} parent=47 // pred_fallthru
          _
      $region48: #{tpu_custom_call.1} parent=5 // pred_fallthru
        _
    $region6: #{tpu_custom_call.1} parent=1 // loop_footer
      %s18 = sadd.s32 1, %s14
    $region7: #{tpu_custom_call.1} parent=1 // loop_footer_branch
      %13 = sbr.rel target = $region3
    $region8: #{tpu_custom_call.1} parent=1 // loop_exit
      _
    %496 = vsyncpa [#allocation3], 1
    %s497 = scalar_lea.sflag [#allocation3], 1
    %498 = vsyncpa %s497, 1

</llo_original>
